<compile_context>
chip_gen: v5e
topology: v5e:2x2
jax: 0.10.0
libtpu: 0.0.40
codegen_flags: <defaults>
</compile_context>

<pallas_src>
import jax
import jax.numpy as jnp
import numpy as np
from jax.experimental import pallas as pl
from jax.experimental.pallas import tpu as pltpu


_VMEM_TABLE_LIMIT_BYTES = 8 * 1024 * 1024   # table <= 8 MiB -> keep it VMEM-resident
_DMA_RING = 8                               # outstanding row DMAs in the HBM path


def _round_up(n, m):
    return ((n + m - 1) // m) * m


# ---------------------------------------------------------------------------
# Path 1: table resident in VMEM (small / medium tables).
# ---------------------------------------------------------------------------
def _vmem_gather_kernel(ids_ref, tbl_ref, out_ref):
    """out[r, :] = tbl[ids[i0 + r], :] for the block_s rows of this grid step.

    ids_ref : SMEM (S_pad,) int32   (scalar prefetch)
    tbl_ref : VMEM (V, E)   table dtype (resident across grid steps)
    out_ref : VMEM (block_s, E) float32
    """
    block_s = out_ref.shape[0]
    v = tbl_ref.shape[0]
    i0 = pl.program_id(0) * block_s
    for r in range(block_s):                        # static unroll, block_s <= 64
        row = jnp.clip(ids_ref[i0 + r], 0, v - 1)   # clamp like jnp.take
        out_ref[pl.ds(r, 1), :] = tbl_ref[pl.ds(row, 1), :].astype(out_ref.dtype)


def _gather_rows_vmem(ids_pad, emb_table, block_s):
    s_pad = ids_pad.shape[0]
    v, e = emb_table.shape
    return pl.pallas_call(
        _vmem_gather_kernel,
        out_shape=jax.ShapeDtypeStruct((s_pad, e), jnp.float32),
        grid_spec=pltpu.PrefetchScalarGridSpec(
            num_scalar_prefetch=1,                                   # ids -> SMEM
            grid=(s_pad // block_s,),
            in_specs=[pl.BlockSpec((v, e), lambda i, ids: (0, 0))],  # table stays resident
            out_specs=pl.BlockSpec((block_s, e), lambda i, ids: (i, 0)),
        ),
        compiler_params=pltpu.CompilerParams(
            dimension_semantics=("parallel",)),      # shard S blocks across TCs (v7x)
    )(ids_pad, emb_table)


# ---------------------------------------------------------------------------
# Path 2: table in HBM, per-row DMAs straight into out_ref (large tables).
# ---------------------------------------------------------------------------
def _hbm_gather_kernel(ids_ref, tbl_hbm, out_ref, sems):
    """Row-gather via async DMAs from HBM directly into the output block.

    ids_ref : SMEM (S_pad,) int32   (scalar prefetch)
    tbl_hbm : HBM  (V, E)   table dtype (pl.ANY, manual DMA)
    out_ref : VMEM (block_s, E) table dtype
    sems    : ring of K DMA semaphores
    """
    block_s = out_ref.shape[0]
    v = tbl_hbm.shape[0]
    k = sems.shape[0]
    i0 = pl.program_id(0) * block_s

    def copy(r):
        row = jnp.clip(ids_ref[i0 + r], 0, v - 1)
        return pltpu.make_async_copy(tbl_hbm.at[row], out_ref.at[r], sems.at[r % k])

    # Keep at most k row DMAs in flight (fixed semaphore ring).
    for r in range(block_s):
        if r >= k:
            copy(r - k).wait()
        copy(r).start()
    for r in range(max(0, block_s - k), block_s):
        copy(r).wait()


def _gather_rows_hbm(ids_pad, emb_table, block_s):
    s_pad = ids_pad.shape[0]
    v, e = emb_table.shape
    ring = min(_DMA_RING, block_s)
    return pl.pallas_call(
        _hbm_gather_kernel,
        out_shape=jax.ShapeDtypeStruct((s_pad, e), emb_table.dtype),  # native-dtype rows
        grid_spec=pltpu.PrefetchScalarGridSpec(
            num_scalar_prefetch=1,
            grid=(s_pad // block_s,),
            in_specs=[pl.BlockSpec(memory_space=pl.ANY)],             # table stays in HBM
            out_specs=pl.BlockSpec((block_s, e), lambda i, ids: (i, 0)),
            scratch_shapes=[pltpu.SemaphoreType.DMA((ring,))],
        ),
        compiler_params=pltpu.CompilerParams(
            dimension_semantics=("parallel",)),
    )(ids_pad, emb_table)


# ---------------------------------------------------------------------------
# Public wrapper == PretrainedEmbedding.forward(x, f, g)
# ---------------------------------------------------------------------------
def pretrained_embedding(x_idx, f_tokens, emb_table, g=None, *, force_hbm=False):
    """Pallas version of PretrainedEmbedding.forward(x, f, g). `g` is unused."""
    del g  # unused by the module's forward
    s = x_idx.shape[0]
    v, e = emb_table.shape

    x_i32 = jnp.asarray(x_idx, jnp.int32)
    f_i32 = jnp.asarray(f_tokens, jnp.int32)

    # ids = f[x]: an S-element int32 gather on the wrapper side is negligible and keeps
    # the kernel's scalar prefetch tiny (only S ids live in SMEM, never all of f).
    ids = jnp.take(f_i32, x_i32, axis=0, mode="clip")

    # Pad S so the output block is (8,128)-aligned and the grid divides evenly.
    s8 = _round_up(s, 8)
    block_s = min(64, s8)
    s_pad = _round_up(s, block_s)
    ids_pad = jnp.pad(ids, (0, s_pad - s))

    table_bytes = v * e * np.dtype(emb_table.dtype).itemsize
    if force_hbm or table_bytes > _VMEM_TABLE_LIMIT_BYTES:
        out = _gather_rows_hbm(ids_pad, emb_table, block_s)
    else:
        out = _gather_rows_vmem(ids_pad, emb_table, block_s)

    out = out[:s]
    if out.dtype != jnp.float32:
        out = out.astype(jnp.float32)     # cast only the tiny (S, E) result
    return out


def pretrained_embedding_ref(x_idx, f_tokens, emb_table):
    """Pure-JAX reference for verification."""
    ids = jnp.take(jnp.asarray(f_tokens, jnp.int32),
                   jnp.asarray(x_idx, jnp.int32), axis=0, mode="clip")
    return jnp.take(emb_table, ids, axis=0, mode="clip").astype(jnp.float32)


if __name__ == "__main__":
    emb_dim = 128      # embedding width (lane-dense)
    vocab = 256        # rows in the pretrained embedding table
    num_tokens = 64    # len(f)
    seq_len = 8        # len(x)

    key = jax.random.PRNGKey(0)
    k_emb, k_f, k_x = jax.random.split(key, 3)

    emb_table = jax.random.normal(k_emb, (vocab, emb_dim), dtype=jnp.float32)
    f = jax.random.randint(k_f, (num_tokens,), 0, vocab, dtype=jnp.int32)
    x = jax.random.randint(k_x, (seq_len,), 0, num_tokens, dtype=jnp.int32)
    g = None  # unused by the module's forward

    ref = jax.block_until_ready(pretrained_embedding_ref(x, f, emb_table))

    # VMEM-resident-table path (auto-selected: 128 KiB table fits on-chip).
    out_vmem = jax.block_until_ready(pretrained_embedding(x, f, emb_table, g))
    assert out_vmem.shape == (seq_len, emb_dim)
    np.testing.assert_array_equal(np.asarray(out_vmem), np.asarray(ref))

    # HBM row-DMA path (auto-selected for tables too large for VMEM; forced here to test).
    out_hbm = jax.block_until_ready(
        pretrained_embedding(x, f, emb_table, g, force_hbm=True))
    np.testing.assert_array_equal(np.asarray(out_hbm), np.asarray(ref))

    print("KERNEL_OK")
</pallas_src>

<mosaic_0001>
module attributes {stable_mosaic.version = 11 : i64} {
  func.func @_vmem_gather_kernel(%arg0: i32, %arg1: memref<8xi32, #tpu.memory_space<smem>>, %arg2: memref<256x128xf32, #tpu.memory_space<vmem>>, %arg3: memref<8x128xf32, #tpu.memory_space<vmem>>) attributes {dimension_semantics = [#tpu.dimension_semantics<parallel>], iteration_bounds = array<i64: 1>, scalar_prefetch = 1 : i64, scratch_operands = 0 : i64, tpu.core_type = #tpu.core_type<tc>, window_params = [{pipeline_mode = #tpu.pipeline_mode<synchronous>, transform_indices = @transform_0, window_bounds = array<i64: 256, 128>}, {transform_indices = @transform_1, window_bounds = array<i64: 8, 128>}]} {
    %c8_i32 = arith.constant 8 : i32
    %0 = arith.muli %arg0, %c8_i32 : i32
    %c0_i32 = arith.constant 0 : i32
    %1 = arith.addi %0, %c0_i32 : i32
    %2 = arith.index_cast %1 : i32 to index
    %3 = memref.load %arg1[%2] : memref<8xi32, #tpu.memory_space<smem>>
    %c0_i32_0 = arith.constant 0 : i32
    %c255_i32 = arith.constant 255 : i32
    %4 = arith.maxsi %c0_i32_0, %3 : i32
    %5 = arith.minsi %c255_i32, %4 : i32
    %6 = arith.index_cast %5 : i32 to index
    %c0 = arith.constant 0 : index
    %7 = vector.load %arg2[%6, %c0] : memref<256x128xf32, #tpu.memory_space<vmem>>, vector<1x128xf32>
    %c0_1 = arith.constant 0 : index
    %c0_2 = arith.constant 0 : index
    %8 = vector.load %arg3[%c0_1, %c0_2] : memref<8x128xf32, #tpu.memory_space<vmem>>, vector<1x128xf32>
    tpu.vector_store %arg3[%c0_1, %c0_2], %7 {strides = array<i32>} : memref<8x128xf32, #tpu.memory_space<vmem>>, vector<1x128xf32>,
    %c1_i32 = arith.constant 1 : i32
    %9 = arith.addi %0, %c1_i32 : i32
    %10 = arith.index_cast %9 : i32 to index
    %11 = memref.load %arg1[%10] : memref<8xi32, #tpu.memory_space<smem>>
    %c0_i32_3 = arith.constant 0 : i32
    %c255_i32_4 = arith.constant 255 : i32
    %12 = arith.maxsi %c0_i32_3, %11 : i32
    %13 = arith.minsi %c255_i32_4, %12 : i32
    %14 = arith.index_cast %13 : i32 to index
    %c0_5 = arith.constant 0 : index
    %15 = vector.load %arg2[%14, %c0_5] : memref<256x128xf32, #tpu.memory_space<vmem>>, vector<1x128xf32>
    %c1 = arith.constant 1 : index
    %c0_6 = arith.constant 0 : index
    %16 = vector.load %arg3[%c1, %c0_6] : memref<8x128xf32, #tpu.memory_space<vmem>>, vector<1x128xf32>
    tpu.vector_store %arg3[%c1, %c0_6], %15 {strides = array<i32>} : memref<8x128xf32, #tpu.memory_space<vmem>>, vector<1x128xf32>,
    %c2_i32 = arith.constant 2 : i32
    %17 = arith.addi %0, %c2_i32 : i32
    %18 = arith.index_cast %17 : i32 to index
    %19 = memref.load %arg1[%18] : memref<8xi32, #tpu.memory_space<smem>>
    %c0_i32_7 = arith.constant 0 : i32
    %c255_i32_8 = arith.constant 255 : i32
    %20 = arith.maxsi %c0_i32_7, %19 : i32
    %21 = arith.minsi %c255_i32_8, %20 : i32
    %22 = arith.index_cast %21 : i32 to index
    %c0_9 = arith.constant 0 : index
    %23 = vector.load %arg2[%22, %c0_9] : memref<256x128xf32, #tpu.memory_space<vmem>>, vector<1x128xf32>
    %c2 = arith.constant 2 : index
    %c0_10 = arith.constant 0 : index
    %24 = vector.load %arg3[%c2, %c0_10] : memref<8x128xf32, #tpu.memory_space<vmem>>, vector<1x128xf32>
    tpu.vector_store %arg3[%c2, %c0_10], %23 {strides = array<i32>} : memref<8x128xf32, #tpu.memory_space<vmem>>, vector<1x128xf32>,
    %c3_i32 = arith.constant 3 : i32
    %25 = arith.addi %0, %c3_i32 : i32
    %26 = arith.index_cast %25 : i32 to index
    %27 = memref.load %arg1[%26] : memref<8xi32, #tpu.memory_space<smem>>
    %c0_i32_11 = arith.constant 0 : i32
    %c255_i32_12 = arith.constant 255 : i32
    %28 = arith.maxsi %c0_i32_11, %27 : i32
    %29 = arith.minsi %c255_i32_12, %28 : i32
    %30 = arith.index_cast %29 : i32 to index
    %c0_13 = arith.constant 0 : index
    %31 = vector.load %arg2[%30, %c0_13] : memref<256x128xf32, #tpu.memory_space<vmem>>, vector<1x128xf32>
    %c3 = arith.constant 3 : index
    %c0_14 = arith.constant 0 : index
    %32 = vector.load %arg3[%c3, %c0_14] : memref<8x128xf32, #tpu.memory_space<vmem>>, vector<1x128xf32>
    tpu.vector_store %arg3[%c3, %c0_14], %31 {strides = array<i32>} : memref<8x128xf32, #tpu.memory_space<vmem>>, vector<1x128xf32>,
    %c4_i32 = arith.constant 4 : i32
    %33 = arith.addi %0, %c4_i32 : i32
    %34 = arith.index_cast %33 : i32 to index
    %35 = memref.load %arg1[%34] : memref<8xi32, #tpu.memory_space<smem>>
    %c0_i32_15 = arith.constant 0 : i32
    %c255_i32_16 = arith.constant 255 : i32
    %36 = arith.maxsi %c0_i32_15, %35 : i32
    %37 = arith.minsi %c255_i32_16, %36 : i32
    %38 = arith.index_cast %37 : i32 to index
    %c0_17 = arith.constant 0 : index
    %39 = vector.load %arg2[%38, %c0_17] : memref<256x128xf32, #tpu.memory_space<vmem>>, vector<1x128xf32>
    %c4 = arith.constant 4 : index
    %c0_18 = arith.constant 0 : index
    %40 = vector.load %arg3[%c4, %c0_18] : memref<8x128xf32, #tpu.memory_space<vmem>>, vector<1x128xf32>
    tpu.vector_store %arg3[%c4, %c0_18], %39 {strides = array<i32>} : memref<8x128xf32, #tpu.memory_space<vmem>>, vector<1x128xf32>,
    %c5_i32 = arith.constant 5 : i32
    %41 = arith.addi %0, %c5_i32 : i32
    %42 = arith.index_cast %41 : i32 to index
    %43 = memref.load %arg1[%42] : memref<8xi32, #tpu.memory_space<smem>>
    %c0_i32_19 = arith.constant 0 : i32
    %c255_i32_20 = arith.constant 255 : i32
    %44 = arith.maxsi %c0_i32_19, %43 : i32
    %45 = arith.minsi %c255_i32_20, %44 : i32
    %46 = arith.index_cast %45 : i32 to index
    %c0_21 = arith.constant 0 : index
    %47 = vector.load %arg2[%46, %c0_21] : memref<256x128xf32, #tpu.memory_space<vmem>>, vector<1x128xf32>
    %c5 = arith.constant 5 : index
    %c0_22 = arith.constant 0 : index
    %48 = vector.load %arg3[%c5, %c0_22] : memref<8x128xf32, #tpu.memory_space<vmem>>, vector<1x128xf32>
    tpu.vector_store %arg3[%c5, %c0_22], %47 {strides = array<i32>} : memref<8x128xf32, #tpu.memory_space<vmem>>, vector<1x128xf32>,
    %c6_i32 = arith.constant 6 : i32
    %49 = arith.addi %0, %c6_i32 : i32
    %50 = arith.index_cast %49 : i32 to index
    %51 = memref.load %arg1[%50] : memref<8xi32, #tpu.memory_space<smem>>
    %c0_i32_23 = arith.constant 0 : i32
    %c255_i32_24 = arith.constant 255 : i32
    %52 = arith.maxsi %c0_i32_23, %51 : i32
    %53 = arith.minsi %c255_i32_24, %52 : i32
    %54 = arith.index_cast %53 : i32 to index
    %c0_25 = arith.constant 0 : index
    %55 = vector.load %arg2[%54, %c0_25] : memref<256x128xf32, #tpu.memory_space<vmem>>, vector<1x128xf32>
    %c6 = arith.constant 6 : index
    %c0_26 = arith.constant 0 : index
    %56 = vector.load %arg3[%c6, %c0_26] : memref<8x128xf32, #tpu.memory_space<vmem>>, vector<1x128xf32>
    tpu.vector_store %arg3[%c6, %c0_26], %55 {strides = array<i32>} : memref<8x128xf32, #tpu.memory_space<vmem>>, vector<1x128xf32>,
    %c7_i32 = arith.constant 7 : i32
    %57 = arith.addi %0, %c7_i32 : i32
    %58 = arith.index_cast %57 : i32 to index
    %59 = memref.load %arg1[%58] : memref<8xi32, #tpu.memory_space<smem>>
    %c0_i32_27 = arith.constant 0 : i32
    %c255_i32_28 = arith.constant 255 : i32
    %60 = arith.maxsi %c0_i32_27, %59 : i32
    %61 = arith.minsi %c255_i32_28, %60 : i32
    %62 = arith.index_cast %61 : i32 to index
    %c0_29 = arith.constant 0 : index
    %63 = vector.load %arg2[%62, %c0_29] : memref<256x128xf32, #tpu.memory_space<vmem>>, vector<1x128xf32>
    %c7 = arith.constant 7 : index
    %c0_30 = arith.constant 0 : index
    %64 = vector.load %arg3[%c7, %c0_30] : memref<8x128xf32, #tpu.memory_space<vmem>>, vector<1x128xf32>
    tpu.vector_store %arg3[%c7, %c0_30], %63 {strides = array<i32>} : memref<8x128xf32, #tpu.memory_space<vmem>>, vector<1x128xf32>,
    return
  }
  func.func @transform_0(%arg0: i32, %arg1: memref<8xi32, #tpu.memory_space<smem>>) -> (i32, i32) {
    %c0_i32 = arith.constant 0 : i32
    %c0_i32_0 = arith.constant 0 : i32
    %c0_i32_1 = arith.constant 0 : i32
    return %c0_i32, %c0_i32_0 : i32, i32
  }
  func.func @transform_1(%arg0: i32, %arg1: memref<8xi32, #tpu.memory_space<smem>>) -> (i32, i32) {
    %c0_i32 = arith.constant 0 : i32
    %c0_i32_0 = arith.constant 0 : i32
    return %arg0, %c0_i32 : i32, i32
  }
}

</mosaic_0001>

<llo_original>
// kernel: tpu_custom_call.1
$region0: #{tpu_custom_call.1}
  #allocation0 [shape = 'u32[]', space=smem, size = 0x4, offset = 0x4, fixed_abs, tag = 'smem constant byte address 0x4 - core index']
  #allocation1 [shape = 'u32[72,128]{1,0:T(1,128)}', space=vmem, size = 0x9000, scoped, tag = 'internal scratch']
  #allocation2 [shape = 's32[1]{0}', space=sflag, size = 0x4, scoped, tag = 'scoped memory for tpu_custom_call.1']
  #allocation3 [shape = 'u8[512]{0}', space=smem, size = 0x200, scoped, tag = 'prefetched SMEM operand 0']
  %s0 = inlined_call_operand.hbm [shape: s32[8], index: 0, kind: input, shape index: {}]
  %s1 = inlined_call_operand.hbm [shape: f32[256,128], index: 1, kind: input, shape index: {}]
  %s2 = inlined_call_operand.hbm [shape: f32[8,128], index: 2, kind: output, shape index: {}]
  %s3 = sld [smem:[#allocation0]]
  $region18: #{tpu_custom_call.1} parent=0
    _
  %s5 = ssub.s32 1, %s3
  %s6 = scalar_select 0, %s5, %s3
  %s8 = sshll.u32 %s0, 4
  %s9 = int_to_ptr.hbm [resolvable:$true] %s8
  %11 = dma.hbm_to_smem %s9, 16, [#allocation3], [#allocation2]
  %13 = dma.done [#allocation2], 16
  %14 = sfence
  $region1: #{tpu_custom_call.1} parent=0
    #allocation4 [shape = 'u8[131072]{0}', space=vmem, size = 0x20000, scoped, tag = 'input window, operand 1, single buffered']
    #allocation5 [shape = 's32[1]{0}', space=sflag, size = 0x4, scoped, tag = 'scoped memory for tpu_custom_call.1']
    #allocation6 [shape = 's32[1]{0}', space=sflag, size = 0x4, scoped, tag = 'scoped memory for tpu_custom_call.1']
    #allocation7 [shape = 'u8[4096]{0}', space=vmem, size = 0x1000, scoped, tag = 'output window, operand 0, single buffered']
    %15 = vsyncpa [#allocation5], 0
    %16 = vsyncpa [#allocation6], 0
    // Predicated region
    $region2: #{tpu_custom_call.1} parent=1 // pred_check
      _
    $region3: #{tpu_custom_call.1} parent=1 // pred_check_branch
      %18 = sbr.rel (0) target = $region5
    $region4: #{tpu_custom_call.1} parent=1 // pred_region
      %20 = vsyncadd [#allocation5], 0
      %s21 = sshll.u32 %s1, 4
      %s22 = int_to_ptr.hbm [resolvable:$true] %s21
      %s23 = sshll.u32 [#allocation4], 4
      %s24 = int_to_ptr.vmem [resolvable:$true] %s23
      %29 = dma.hbm_to_vmem [thread:$0]  %s22, 4096, %s24, [#allocation5], 128, 128, 8
    $region5: #{tpu_custom_call.1} parent=1 // pred_fallthru
      _
    // Predicated region
    $region6: #{tpu_custom_call.1} parent=1 // pred_check
      _
    $region7: #{tpu_custom_call.1} parent=1 // pred_check_branch
      %31 = sbr.rel (0) target = $region9
    $region8: #{tpu_custom_call.1} parent=1 // pred_region
      %33 = dma.done [#allocation5], 4096
    $region9: #{tpu_custom_call.1} parent=1 // pred_fallthru
      _
    %s34 = smul.u32 0, 8
    %s35 = sld [smem:[#allocation3 + %s34]]
    %p36 = scmp.gt.s32.totalorder %s35, 0
    %s37 = scalar_select %p36, %s35, 0
    %p38 = scmp.lt.s32.totalorder %s37, 255
    %s39 = scalar_select %p38, %s37, 255
    %s40 = scalar_lea.vmem [#allocation4], %s39
    %v41 = vld [vmem:[%s40] sm:$0x1]
    %42 = vst [vmem:[#allocation7] sm:$0x1] %v41
    %s43 = sadd.s32 %s34, 1
    %s44 = sld [smem:[#allocation3 + %s43]]
    %p45 = scmp.gt.s32.totalorder %s44, 0
    %s46 = scalar_select %p45, %s44, 0
    %p47 = scmp.lt.s32.totalorder %s46, 255
    %s48 = scalar_select %p47, %s46, 255
    %s49 = scalar_lea.vmem [#allocation4], %s48
    %v50 = vld [vmem:[%s49] sm:$0x1]
    %51 = vst [vmem:[#allocation7 + $0x1] sm:$0x1] %v50
    %s52 = sadd.s32 %s34, 2
    %s53 = sld [smem:[#allocation3 + %s52]]
    %p54 = scmp.gt.s32.totalorder %s53, 0
    %s55 = scalar_select %p54, %s53, 0
    %p56 = scmp.lt.s32.totalorder %s55, 255
    %s57 = scalar_select %p56, %s55, 255
    %s58 = scalar_lea.vmem [#allocation4], %s57
    %v59 = vld [vmem:[%s58] sm:$0x1]
    %60 = vst [vmem:[#allocation7 + $0x2] sm:$0x1] %v59
    %s61 = sadd.s32 %s34, 3
    %s62 = sld [smem:[#allocation3 + %s61]]
    %p63 = scmp.gt.s32.totalorder %s62, 0
    %s64 = scalar_select %p63, %s62, 0
    %p65 = scmp.lt.s32.totalorder %s64, 255
    %s66 = scalar_select %p65, %s64, 255
    %s67 = scalar_lea.vmem [#allocation4], %s66
    %v68 = vld [vmem:[%s67] sm:$0x1]
    %69 = vst [vmem:[#allocation7 + $0x3] sm:$0x1] %v68
    %s70 = sadd.s32 %s34, 4
    %s71 = sld [smem:[#allocation3 + %s70]]
    %p72 = scmp.gt.s32.totalorder %s71, 0
    %s73 = scalar_select %p72, %s71, 0
    %p74 = scmp.lt.s32.totalorder %s73, 255
    %s75 = scalar_select %p74, %s73, 255
    %s76 = scalar_lea.vmem [#allocation4], %s75
    %v77 = vld [vmem:[%s76] sm:$0x1]
    %78 = vst [vmem:[#allocation7 + $0x4] sm:$0x1] %v77
    %s79 = sadd.s32 %s34, 5
    %s80 = sld [smem:[#allocation3 + %s79]]
    %p81 = scmp.gt.s32.totalorder %s80, 0
    %s82 = scalar_select %p81, %s80, 0
    %p83 = scmp.lt.s32.totalorder %s82, 255
    %s84 = scalar_select %p83, %s82, 255
    %s85 = scalar_lea.vmem [#allocation4], %s84
    %v86 = vld [vmem:[%s85] sm:$0x1]
    %87 = vst [vmem:[#allocation7 + $0x5] sm:$0x1] %v86
    %s88 = sadd.s32 %s34, 6
    %s89 = sld [smem:[#allocation3 + %s88]]
    %p90 = scmp.gt.s32.totalorder %s89, 0
    %s91 = scalar_select %p90, %s89, 0
    %p92 = scmp.lt.s32.totalorder %s91, 255
    %s93 = scalar_select %p92, %s91, 255
    %s94 = scalar_lea.vmem [#allocation4], %s93
    %v95 = vld [vmem:[%s94] sm:$0x1]
    %96 = vst [vmem:[#allocation7 + $0x6] sm:$0x1] %v95
    %s97 = sadd.s32 %s34, 7
    %s98 = sld [smem:[#allocation3 + %s97]]
    %p99 = scmp.gt.s32.totalorder %s98, 0
    %s100 = scalar_select %p99, %s98, 0
    %p101 = scmp.lt.s32.totalorder %s100, 255
    %s102 = scalar_select %p101, %s100, 255
    %s103 = scalar_lea.vmem [#allocation4], %s102
    %v104 = vld [vmem:[%s103] sm:$0x1]
    %105 = vst [vmem:[#allocation7 + $0x7] sm:$0x1] %v104
    // Predicated region
    $region10: #{tpu_custom_call.1} parent=1 // pred_check
      _
    $region11: #{tpu_custom_call.1} parent=1 // pred_check_branch
      %107 = sbr.rel (0) target = $region13
    $region12: #{tpu_custom_call.1} parent=1 // pred_region
      %109 = vsyncadd [#allocation6], 0
      %s111 = sshll.u32 [#allocation7], 4
      %s112 = int_to_ptr.vmem [resolvable:$true] %s111
      %s113 = sshll.u32 %s2, 4
      %s114 = int_to_ptr.hbm [resolvable:$true] %s113
      %116 = dma.vmem_to_hbm [thread:$0]  %s112, 128, %s114, [#allocation6]
    $region13: #{tpu_custom_call.1} parent=1 // pred_fallthru
      _
    // Predicated region
    $region14: #{tpu_custom_call.1} parent=1 // pred_check
      _
    $region15: #{tpu_custom_call.1} parent=1 // pred_check_branch
      %118 = sbr.rel (0) target = $region17
    $region16: #{tpu_custom_call.1} parent=1 // pred_region
      %120 = dma.done [#allocation6], 128
    $region17: #{tpu_custom_call.1} parent=1 // pred_fallthru
      _
    %121 = vsyncpa [#allocation5], 1
    %122 = vsyncpa [#allocation6], 1

</llo_original>
